<compile_context>
chip_gen: v5e
topology: v5e:2x2
jax: 0.10.0
libtpu: 0.0.40
codegen_flags: <defaults>
</compile_context>

<pallas_src>
import jax
import jax.numpy as jnp
from jax import lax
from jax.experimental import pallas as pl
from jax.experimental.pallas import tpu as pltpu


def _round_up(x: int, m: int) -> int:
    return ((x + m - 1) // m) * m


# ---------------------------------------------------------------------------
# Fused Pallas kernel
# ---------------------------------------------------------------------------
def _clip_fused_kernel(scale_ref, pooled_ref, txt_ref, w_img_ref,
                       w_txt_eos_ref, out_ref):
    # scale_ref    : [1, 1]    SMEM  exp(temperature), precomputed on the host
    # pooled_ref   : [Bm, Cp]  VMEM  bf16 pooled image features (zero padded)
    # txt_ref      : [Bn, Dp]  VMEM  bf16 text input gathered at the EOS rows
    # w_img_ref    : [Cp, Dp]  VMEM  bf16 image projection, [in, out] layout
    # w_txt_eos_ref: [Dp, Dp]  VMEM  bf16 fused (text-linear @ eos_proj) weight
    # out_ref      : [Bm, Bn]  VMEM  f32 similarity scores (lane-dense store)
    f32 = jnp.float32
    bf16 = jnp.bfloat16

    # Image projection (MXU, bf16 feeds already prepared host-side, f32 acc).
    img = jnp.dot(pooled_ref[...], w_img_ref[...],
                  preferred_element_type=f32)                        # [Bm, Dp]
    # Text-encoder stand-in + eos_proj, fused into a single bias-free matmul
    # (exact composition: x @ Wt.T @ We.T == x @ (Wt.T @ We.T)).
    txt = jnp.dot(txt_ref[...], w_txt_eos_ref[...],
                  preferred_element_type=f32)                        # [Bn, Dp]

    # Cosine similarity via rsqrt row scaling (EUP) instead of a [B, B] divide;
    # exp(temperature) is folded into the O(Bn) text row scale (never applied
    # to the [Bm, Bn] score matrix).  eps only guards all-zero padding rows.
    eps = f32(1e-12)
    inv_img = lax.rsqrt(jnp.sum(img * img, axis=-1, keepdims=True) + eps)
    inv_txt = lax.rsqrt(jnp.sum(txt * txt, axis=-1, keepdims=True) + eps)
    img_n = img * inv_img                                            # [Bm, Dp]
    txt_n = txt * (inv_txt * scale_ref[0, 0])                        # [Bn, Dp]

    # scores = img_n @ txt_n.T, expressed as dot_general contracting on D.
    # At this (<=128x128) size any RHS relayout Mosaic emits is essentially
    # free; the large-B grid version should restructure the text branch to
    # avoid a per-tile transpose (see TODO in clip_fused).
    out_ref[...] = lax.dot_general(
        img_n.astype(bf16), txt_n.astype(bf16),
        dimension_numbers=(((1,), (1,)), ((), ())),
        preferred_element_type=f32)                                  # [Bm, Bn]


# ---------------------------------------------------------------------------
# One-time parameter preparation (hoisted out of the per-call path)
# ---------------------------------------------------------------------------
def prepare_clip_params(params):
    """Pre-transpose, zero-pad and bf16-cast the kernel's weight operands once."""
    D, C = params["w_img"].shape
    Cp = _round_up(C, 128)
    Dp = _round_up(D, 128)

    # [out, in] -> [in, out], pad lane dims to 128, cast to bf16 once.
    w_img_prep = jnp.pad(params["w_img"].T.astype(jnp.float32),
                         ((0, Cp - C), (0, Dp - D))).astype(jnp.bfloat16)
    # Fuse the two bias-free text linears: x @ Wt.T @ We.T == x @ (Wt.T @ We.T).
    w_txt_eos = params["w_txt"].T.astype(jnp.float32) @ params["w_eos"].T.astype(jnp.float32)
    w_txt_eos_prep = jnp.pad(w_txt_eos,
                             ((0, Dp - D), (0, Dp - D))).astype(jnp.bfloat16)
    # exp(temperature) hoisted to host; passed as a [1, 1] SMEM scalar.
    scale_prep = jnp.reshape(jnp.exp(jnp.asarray(params["temperature"], jnp.float32)),
                             (1, 1))

    prepped = dict(params)
    prepped["w_img_prep"] = w_img_prep
    prepped["w_txt_eos_prep"] = w_txt_eos_prep
    prepped["scale_prep"] = scale_prep
    return prepped


def clip_fused(pooled, txt_eos_in, w_img_prep, w_txt_eos_prep, scale):
    B, C = pooled.shape
    D = txt_eos_in.shape[1]
    Cp, Dp = w_img_prep.shape

    # Rows are NOT padded to 128 anymore:
    #   Bm (image rows, output sublane dim): pad to 16 (bf16 sublane pack)
    #   Bn (text rows, output lane dim)    : pad to 128 (lane-dense vst)
    Bm = _round_up(B, 16)
    Bn = _round_up(B, 128)

    # Pad then cast to bf16 host-side so the kernel has no input casts.
    pooled_p = jnp.pad(pooled.astype(jnp.float32),
                       ((0, Bm - B), (0, Cp - C))).astype(jnp.bfloat16)
    txt_p = jnp.pad(txt_eos_in.astype(jnp.float32),
                    ((0, Bn - B), (0, Dp - D))).astype(jnp.bfloat16)

    # TODO(synk): at real contrastive batch sizes (B >= 1024) this becomes a
    # grid=(B//tm, B//tn) kernel with ("parallel", "parallel", "arbitrary")
    # semantics (both output axes parallel so v7x's 2 TCs split the (i,j)
    # space), tn/tk as multiples of 256 on v6e/v7x (2x256x256 MXU) and 128 on
    # v5e (4x128x128 MXU), the text branch restructured so txt_n arrives
    # pre-transposed (no per-tile XLU vxpose), and explicit
    # pltpu.CompilerParams(vmem_limit_bytes=...) with a ~half-of-v6e tile
    # budget on v7x (64 MiB VMEM) and a raised limit on v5e (16 MiB default
    # scoped VMEM).  At B=2 / D=32 a single whole-array block is optimal.
    out_p = pl.pallas_call(
        _clip_fused_kernel,
        out_shape=jax.ShapeDtypeStruct((Bm, Bn), jnp.float32),
        in_specs=[
            pl.BlockSpec(memory_space=pltpu.MemorySpace.SMEM),   # exp(temperature)
            pl.BlockSpec(memory_space=pltpu.MemorySpace.VMEM),   # pooled image feats (bf16)
            pl.BlockSpec(memory_space=pltpu.MemorySpace.VMEM),   # text EOS input (bf16)
            pl.BlockSpec(memory_space=pltpu.MemorySpace.VMEM),   # w_img [in,out] bf16
            pl.BlockSpec(memory_space=pltpu.MemorySpace.VMEM),   # fused w_txt_eos bf16
        ],
        out_specs=pl.BlockSpec(memory_space=pltpu.MemorySpace.VMEM),
    )(scale, pooled_p, txt_p, w_img_prep, w_txt_eos_prep)
    return out_p[:B, :B]


# ---------------------------------------------------------------------------
# CLIP forward (wrapper glue: pooling + EOS gather are tiny host/XLA ops)
# ---------------------------------------------------------------------------
def clip_forward(prepped, imgs, cap_tokens, cap_mask_padding, cap_mask_causal,
                 eos_token):
    B, _ = cap_tokens.shape

    # image encoder stand-in: global average pool (tiny reduction, XLA glue)
    pooled = jnp.mean(imgs, axis=(2, 3))                               # [B, C]

    # Gather the EOS rows BEFORE the text linear: only B of the B*T token rows
    # are ever used downstream, so only those feed the kernel's matmul.
    eos_pos = jnp.argmax((cap_tokens == eos_token).astype(jnp.int32), axis=1)
    rows = jnp.arange(B)
    tok_at_eos = cap_tokens[rows, eos_pos]                             # [B]
    emb_at_eos = jnp.take(prepped["embed"], tok_at_eos, axis=0)        # [B, D]
    emb_at_eos = emb_at_eos + prepped["pos_embed"][eos_pos]            # [B, D]
    not_pad = 1.0 - cap_mask_padding[rows, eos_pos].astype(jnp.float32)
    txt_eos_in = emb_at_eos * not_pad[:, None]                         # [B, D]
    # TODO(synk): cap_mask_causal is consumed by the real transformer text
    # encoder (external module); the per-token stand-in does not use it.

    return clip_fused(pooled, txt_eos_in, prepped["w_img_prep"],
                      prepped["w_txt_eos_prep"], prepped["scale_prep"])  # [B, B]


# Pure-JAX reference (mirrors the PyTorch module path, full encoded_txt)
def clip_forward_ref(params, imgs, cap_tokens, cap_mask_padding, cap_mask_causal,
                     eos_token):
    B, T = cap_tokens.shape
    pooled = jnp.mean(imgs, axis=(2, 3))
    img_emb = pooled @ params["w_img"].T
    emb = jnp.take(params["embed"], cap_tokens, axis=0) + params["pos_embed"][None]
    emb = emb * (1.0 - cap_mask_padding.astype(jnp.float32))[..., None]
    enc = emb @ params["w_txt"].T                                      # [B, T, D]
    eos_pos = jnp.argmax((cap_tokens == eos_token).astype(jnp.int32), axis=1)
    txt_eos = enc[jnp.arange(B), eos_pos]
    txt_emb = txt_eos @ params["w_eos"].T
    img_n = jnp.linalg.norm(img_emb, axis=1, keepdims=True)
    txt_n = jnp.linalg.norm(txt_emb, axis=1, keepdims=True)
    cos = (img_emb @ txt_emb.T) / (img_n @ txt_n.T)
    return cos * jnp.exp(params["temperature"])


# ---------------------------------------------------------------------------
# Main
# ---------------------------------------------------------------------------
if __name__ == "__main__":
    B, C, H, W = 2, 4, 16, 16     # imgs
    T = 8                         # caption length
    D = 32                        # d_model
    V = 16                        # vocab size
    EOS = 3                       # eos_token

    key = jax.random.PRNGKey(0)
    k_img, k_w_img, k_emb, k_pos, k_w_txt, k_w_eos, k_tok = jax.random.split(key, 7)

    imgs = jax.random.normal(k_img, (B, C, H, W), dtype=jnp.float32)

    # captions: random tokens, EOS placed once per caption, padding after EOS
    cap_tokens = jax.random.randint(k_tok, (B, T), 4, V).astype(jnp.int32)
    eos_positions = jnp.array([5, 6], dtype=jnp.int32)
    col = jnp.arange(T)[None, :]
    cap_tokens = jnp.where(col == eos_positions[:, None], EOS, cap_tokens)
    cap_tokens = jnp.where(col > eos_positions[:, None], 0, cap_tokens)
    cap_mask_padding = (col > eos_positions[:, None])                 # [B, T] bool
    cap_mask_causal = jnp.triu(jnp.ones((T, T), jnp.bool_), k=1)      # [T, T] bool

    params = {
        "w_img": 0.1 * jax.random.normal(k_w_img, (D, C), jnp.float32),
        "embed": 0.1 * jax.random.normal(k_emb, (V, D), jnp.float32),
        "pos_embed": 0.1 * jax.random.normal(k_pos, (T, D), jnp.float32),
        "w_txt": 0.1 * jax.random.normal(k_w_txt, (D, D), jnp.float32),
        "w_eos": 0.1 * jax.random.normal(k_w_eos, (D, D), jnp.float32),  # eos_proj
        "temperature": jnp.float32(1.0),                                 # nn.Parameter(1.0)
    }

    # One-time weight prep (transpose + pad + bf16 cast + text-linear fusion).
    prepped = prepare_clip_params(params)

    scores = clip_forward(prepped, imgs, cap_tokens, cap_mask_padding,
                          cap_mask_causal, EOS)
    scores = jax.block_until_ready(scores)

    ref = clip_forward_ref(params, imgs, cap_tokens, cap_mask_padding,
                           cap_mask_causal, EOS)
    assert scores.shape == (B, B)
    # bf16 MXU feeds (f32 accumulation) vs. the pure-f32 reference -> loosened
    # tolerance, per review note on precision.
    assert jnp.allclose(scores, ref, atol=5e-2, rtol=5e-2), (
        float(jnp.max(jnp.abs(scores - ref))))

    print("KERNEL_OK")
</pallas_src>

<mosaic_0001>
module attributes {stable_mosaic.version = 11 : i64} {
  func.func @_clip_fused_kernel(%arg0: memref<1x1xf32, #tpu.memory_space<smem>>, %arg1: memref<16x128xbf16, #tpu.memory_space<vmem>>, %arg2: memref<128x128xbf16, #tpu.memory_space<vmem>>, %arg3: memref<128x128xbf16, #tpu.memory_space<vmem>>, %arg4: memref<128x128xbf16, #tpu.memory_space<vmem>>, %arg5: memref<16x128xf32, #tpu.memory_space<vmem>>) attributes {dimension_semantics = [], scalar_prefetch = 0 : i64, scratch_operands = 0 : i64, tpu.core_type = #tpu.core_type<tc>} {
    %c0 = arith.constant 0 : index
    %c0_0 = arith.constant 0 : index
    %0 = vector.load %arg1[%c0, %c0_0] : memref<16x128xbf16, #tpu.memory_space<vmem>>, vector<16x128xbf16>
    %c0_1 = arith.constant 0 : index
    %c0_2 = arith.constant 0 : index
    %1 = vector.load %arg3[%c0_1, %c0_2] : memref<128x128xbf16, #tpu.memory_space<vmem>>, vector<128x128xbf16>
    %cst = arith.constant dense<0.000000e+00> : vector<16x128xf32>
    %2 = tpu.matmul %0, %1, %cst {dimension_numbers = #tpu.dot_dimension_numbers<[1], [0], [0], [1], [0, 0, 1, 1], [], []>} : vector<16x128xbf16>, vector<128x128xbf16>, vector<16x128xf32> -> vector<16x128xf32>
    %c0_3 = arith.constant 0 : index
    %c0_4 = arith.constant 0 : index
    %3 = vector.load %arg2[%c0_3, %c0_4] : memref<128x128xbf16, #tpu.memory_space<vmem>>, vector<128x128xbf16>
    %c0_5 = arith.constant 0 : index
    %c0_6 = arith.constant 0 : index
    %4 = vector.load %arg4[%c0_5, %c0_6] : memref<128x128xbf16, #tpu.memory_space<vmem>>, vector<128x128xbf16>
    %cst_7 = arith.constant dense<0.000000e+00> : vector<128x128xf32>
    %5 = tpu.matmul %3, %4, %cst_7 {dimension_numbers = #tpu.dot_dimension_numbers<[1], [0], [0], [1], [0, 0, 1, 1], [], []>} : vector<128x128xbf16>, vector<128x128xbf16>, vector<128x128xf32> -> vector<128x128xf32>
    %6 = arith.mulf %2, %2 : vector<16x128xf32>
    %cst_8 = arith.constant dense<0.000000e+00> : vector<16xf32>
    %7 = vector.multi_reduction <add>, %6, %cst_8 [1] : vector<16x128xf32> to vector<16xf32>
    %8 = vector.shape_cast %7 : vector<16xf32> to vector<16x1xf32>
    %cst_9 = arith.constant 9.99999996E-13 : f32
    %9 = vector.broadcast %cst_9 : f32 to vector<16x1xf32>
    %10 = arith.addf %8, %9 : vector<16x1xf32>
    %11 = math.rsqrt %10 : vector<16x1xf32>
    %12 = arith.mulf %5, %5 : vector<128x128xf32>
    %cst_10 = arith.constant dense<0.000000e+00> : vector<128xf32>
    %13 = vector.multi_reduction <add>, %12, %cst_10 [1] : vector<128x128xf32> to vector<128xf32>
    %14 = vector.shape_cast %13 : vector<128xf32> to vector<128x1xf32>
    %cst_11 = arith.constant 9.99999996E-13 : f32
    %15 = vector.broadcast %cst_11 : f32 to vector<128x1xf32>
    %16 = arith.addf %14, %15 : vector<128x1xf32>
    %17 = math.rsqrt %16 : vector<128x1xf32>
    %18 = vector.broadcast %11 : vector<16x1xf32> to vector<16x128xf32>
    %19 = arith.mulf %2, %18 : vector<16x128xf32>
    %c0_12 = arith.constant 0 : index
    %c0_13 = arith.constant 0 : index
    %20 = memref.load %arg0[%c0_12, %c0_13] : memref<1x1xf32, #tpu.memory_space<smem>>
    %21 = vector.broadcast %20 : f32 to vector<128x1xf32>
    %22 = arith.mulf %17, %21 : vector<128x1xf32>
    %23 = vector.broadcast %22 : vector<128x1xf32> to vector<128x128xf32>
    %24 = arith.mulf %5, %23 : vector<128x128xf32>
    %25 = arith.truncf %19 : vector<16x128xf32> to vector<16x128xbf16>
    %26 = arith.truncf %24 : vector<128x128xf32> to vector<128x128xbf16>
    %cst_14 = arith.constant dense<0.000000e+00> : vector<16x128xf32>
    %27 = tpu.matmul %25, %26, %cst_14 {dimension_numbers = #tpu.dot_dimension_numbers<[1], [1], [0], [0], [0, 0, 1, 0], [], []>} : vector<16x128xbf16>, vector<128x128xbf16>, vector<16x128xf32> -> vector<16x128xf32>
    %c0_15 = arith.constant 0 : index
    %c0_16 = arith.constant 0 : index
    %28 = vector.load %arg5[%c0_15, %c0_16] : memref<16x128xf32, #tpu.memory_space<vmem>>, vector<16x128xf32>
    tpu.vector_store %arg5[%c0_15, %c0_16], %27 {strides = array<i32>} : memref<16x128xf32, #tpu.memory_space<vmem>>, vector<16x128xf32>,
    return
  }
}

</mosaic_0001>

<llo_original>
// kernel: tpu_custom_call.1
$region0: #{tpu_custom_call.1}
  #allocation0 [shape = 'u32[]', space=smem, size = 0x4, offset = 0x4, fixed_abs, tag = 'smem constant byte address 0x4 - core index']
  #allocation1 [shape = 'u32[72,128]{1,0:T(1,128)}', space=vmem, size = 0x9000, scoped, tag = 'internal scratch']
  #allocation2 [shape = 'f32[1,1]{1,0:T(1,128)S(6)}', space=smem, size = 0x200, scoped, tag = 'scoped memory for tpu_custom_call.1']
  %s0 = inlined_call_operand.<no memory space> [shape: f32[1,1], index: 0, kind: input, shape index: {}]
  %s1 = inlined_call_operand.hbm [shape: bf16[16,128], index: 1, kind: input, shape index: {}]
  %s2 = inlined_call_operand.hbm [shape: bf16[128,128], index: 2, kind: input, shape index: {}]
  %s3 = inlined_call_operand.hbm [shape: bf16[128,128], index: 3, kind: input, shape index: {}]
  %s4 = inlined_call_operand.hbm [shape: bf16[128,128], index: 4, kind: input, shape index: {}]
  %s5 = inlined_call_operand.hbm [shape: f32[16,128], index: 5, kind: output, shape index: {}]
  %s6 = sld [smem:[#allocation0]]
  $region46: #{tpu_custom_call.1} parent=0
    _
  %s8 = ssub.s32 1, %s6
  %s9 = scalar_select 0, %s8, %s6
  %10 = sst [smem:[#allocation2]] %s0
  $region1: #{tpu_custom_call.1} parent=0
    #allocation3 [shape = 'u8[4096]{0}', space=vmem, size = 0x1000, scoped, tag = 'input window, operand 1, single buffered']
    #allocation4 [shape = 's32[1]{0}', space=sflag, size = 0x4, scoped, tag = 'scoped memory for tpu_custom_call.1']
    #allocation5 [shape = 's32[1]{0}', space=sflag, size = 0x4, scoped, tag = 'scoped memory for tpu_custom_call.1']
    #allocation6 [shape = 'u8[32768]{0}', space=vmem, size = 0x8000, scoped, tag = 'input window, operand 2, single buffered']
    #allocation7 [shape = 's32[1]{0}', space=sflag, size = 0x4, scoped, tag = 'scoped memory for tpu_custom_call.1']
    #allocation8 [shape = 'u8[32768]{0}', space=vmem, size = 0x8000, scoped, tag = 'input window, operand 3, single buffered']
    #allocation9 [shape = 'u8[32768]{0}', space=vmem, size = 0x8000, scoped, tag = 'input window, operand 4, single buffered']
    #allocation10 [shape = 's32[1]{0}', space=sflag, size = 0x4, scoped, tag = 'scoped memory for tpu_custom_call.1']
    #allocation11 [shape = 'u8[8192]{0}', space=vmem, size = 0x2000, scoped, tag = 'output window, operand 0, single buffered']
    %11 = vsyncpa [#allocation4], 0
    %12 = vsyncpa [#allocation7], 0
    %13 = vsyncpa [#allocation10], 0
    %14 = vsyncpa [#allocation5], 0
    // Predicated region
    $region2: #{tpu_custom_call.1} parent=1 // pred_check
      _
    $region3: #{tpu_custom_call.1} parent=1 // pred_check_branch
      %16 = sbr.rel (0) target = $region5
    $region4: #{tpu_custom_call.1} parent=1 // pred_region
      _
    $region5: #{tpu_custom_call.1} parent=1 // pred_fallthru
      _
    // Predicated region
    $region6: #{tpu_custom_call.1} parent=1 // pred_check
      _
    $region7: #{tpu_custom_call.1} parent=1 // pred_check_branch
      %18 = sbr.rel (0) target = $region9
    $region8: #{tpu_custom_call.1} parent=1 // pred_region
      %20 = vsyncadd [#allocation4], 0
      %s21 = sshll.u32 %s1, 4
      %s22 = int_to_ptr.hbm [resolvable:$true] %s21
      %s23 = sshll.u32 [#allocation3], 4
      %s24 = int_to_ptr.vmem [resolvable:$true] %s23
      %29 = dma.hbm_to_vmem [thread:$0]  %s22, 128, %s24, [#allocation4], 64, 64, 4
    $region9: #{tpu_custom_call.1} parent=1 // pred_fallthru
      _
    // Predicated region
    $region10: #{tpu_custom_call.1} parent=1 // pred_check
      _
    $region11: #{tpu_custom_call.1} parent=1 // pred_check_branch
      %31 = sbr.rel (0) target = $region13
    $region12: #{tpu_custom_call.1} parent=1 // pred_region
      %33 = vsyncadd [#allocation7], 0
      %s34 = sshll.u32 %s2, 4
      %s35 = int_to_ptr.hbm [resolvable:$true] %s34
      %s36 = sshll.u32 [#allocation6], 4
      %s37 = int_to_ptr.vmem [resolvable:$true] %s36
      %42 = dma.hbm_to_vmem [thread:$0]  %s35, 1024, %s37, [#allocation7], 64, 64, 4
    $region13: #{tpu_custom_call.1} parent=1 // pred_fallthru
      _
    // Predicated region
    $region14: #{tpu_custom_call.1} parent=1 // pred_check
      _
    $region15: #{tpu_custom_call.1} parent=1 // pred_check_branch
      %44 = sbr.rel (0) target = $region17
    $region16: #{tpu_custom_call.1} parent=1 // pred_region
      %46 = vsyncadd [#allocation7], 0
      %s47 = sshll.u32 %s3, 4
      %s48 = int_to_ptr.hbm [resolvable:$true] %s47
      %s49 = sshll.u32 [#allocation8], 4
      %s50 = int_to_ptr.vmem [resolvable:$true] %s49
      %55 = dma.hbm_to_vmem [thread:$0]  %s48, 1024, %s50, [#allocation7], 64, 64, 4
    $region17: #{tpu_custom_call.1} parent=1 // pred_fallthru
      _
    // Predicated region
    $region18: #{tpu_custom_call.1} parent=1 // pred_check
      _
    $region19: #{tpu_custom_call.1} parent=1 // pred_check_branch
      %57 = sbr.rel (0) target = $region21
    $region20: #{tpu_custom_call.1} parent=1 // pred_region
      %59 = vsyncadd [#allocation10], 0
      %s60 = sshll.u32 %s4, 4
      %s61 = int_to_ptr.hbm [resolvable:$true] %s60
      %s62 = sshll.u32 [#allocation9], 4
      %s63 = int_to_ptr.vmem [resolvable:$true] %s62
      %68 = dma.hbm_to_vmem [thread:$0]  %s61, 1024, %s63, [#allocation10], 64, 64, 4
    $region21: #{tpu_custom_call.1} parent=1 // pred_fallthru
      _
    // Predicated region
    $region22: #{tpu_custom_call.1} parent=1 // pred_check
      _
    $region23: #{tpu_custom_call.1} parent=1 // pred_check_branch
      %70 = sbr.rel (0) target = $region25
    $region24: #{tpu_custom_call.1} parent=1 // pred_region
      %72 = dma.done [#allocation4], 128
    $region25: #{tpu_custom_call.1} parent=1 // pred_fallthru
      _
    // Predicated region
    $region26: #{tpu_custom_call.1} parent=1 // pred_check
      _
    $region27: #{tpu_custom_call.1} parent=1 // pred_check_branch
      %74 = sbr.rel (0) target = $region29
    $region28: #{tpu_custom_call.1} parent=1 // pred_region
      %76 = dma.done [#allocation7], 1024
    $region29: #{tpu_custom_call.1} parent=1 // pred_fallthru
      _
    // Predicated region
    $region30: #{tpu_custom_call.1} parent=1 // pred_check
      _
    $region31: #{tpu_custom_call.1} parent=1 // pred_check_branch
      %78 = sbr.rel (0) target = $region33
    $region32: #{tpu_custom_call.1} parent=1 // pred_region
      %80 = dma.done [#allocation7], 1024
    $region33: #{tpu_custom_call.1} parent=1 // pred_fallthru
      _
    // Predicated region
    $region34: #{tpu_custom_call.1} parent=1 // pred_check
      _
    $region35: #{tpu_custom_call.1} parent=1 // pred_check_branch
      %82 = sbr.rel (0) target = $region37
    $region36: #{tpu_custom_call.1} parent=1 // pred_region
      %84 = dma.done [#allocation10], 1024
    $region37: #{tpu_custom_call.1} parent=1 // pred_fallthru
      _
    %v85 = vld [vmem:[#allocation3] sm:$0xf]
    %v86 = vld [vmem:[#allocation3 + $0x4] sm:$0xf]
    %v87 = vld [vmem:[#allocation8] sm:$0xf]
    %v88 = vld [vmem:[#allocation8 + $0x4] sm:$0xf]
    %v89 = vld [vmem:[#allocation8 + $0x8] sm:$0xf]
    %v90 = vld [vmem:[#allocation8 + $0xc] sm:$0xf]
    %v91 = vld [vmem:[#allocation8 + $0x10] sm:$0xf]
    %v92 = vld [vmem:[#allocation8 + $0x14] sm:$0xf]
    %v93 = vld [vmem:[#allocation8 + $0x18] sm:$0xf]
    %v94 = vld [vmem:[#allocation8 + $0x1c] sm:$0xf]
    %v95 = vld [vmem:[#allocation8 + $0x20] sm:$0xf]
    %v96 = vld [vmem:[#allocation8 + $0x24] sm:$0xf]
    %v97 = vld [vmem:[#allocation8 + $0x28] sm:$0xf]
    %v98 = vld [vmem:[#allocation8 + $0x2c] sm:$0xf]
    %v99 = vld [vmem:[#allocation8 + $0x30] sm:$0xf]
    %v100 = vld [vmem:[#allocation8 + $0x34] sm:$0xf]
    %v101 = vld [vmem:[#allocation8 + $0x38] sm:$0xf]
    %v102 = vld [vmem:[#allocation8 + $0x3c] sm:$0xf]
    %v105 = vunpack.c.l.b16 %v85
    %v106 = vunpack.c.l.b16 %v86
    %v107 = vpack.c.b16 %v106, %v105
    %v125 = vunpack.c.l.b16 %v87
    %v126 = vunpack.c.l.b16 %v88
    %v127 = vunpack.c.l.b16 %v89
    %v128 = vunpack.c.l.b16 %v90
    %v129 = vunpack.c.l.b16 %v91
    %v130 = vunpack.c.l.b16 %v92
    %v131 = vunpack.c.l.b16 %v93
    %v132 = vunpack.c.l.b16 %v94
    %v133 = vunpack.c.l.b16 %v95
    %v134 = vunpack.c.l.b16 %v96
    %v135 = vunpack.c.l.b16 %v97
    %v136 = vunpack.c.l.b16 %v98
    %v137 = vunpack.c.l.b16 %v99
    %v138 = vunpack.c.l.b16 %v100
    %v139 = vunpack.c.l.b16 %v101
    %v140 = vunpack.c.l.b16 %v102
    %v141 = vpack.c.b16 %v126, %v125
    %v142 = vpack.c.b16 %v128, %v127
    %v143 = vpack.c.b16 %v130, %v129
    %v144 = vpack.c.b16 %v132, %v131
    %v145 = vpack.c.b16 %v134, %v133
    %v146 = vpack.c.b16 %v136, %v135
    %v147 = vpack.c.b16 %v138, %v137
    %v148 = vpack.c.b16 %v140, %v139
    %157 = vmatpush.bf16.msra.mxu0 %v148
    %158 = vmatpush.bf16.msra.mxu0 %v147
    %159 = vmatpush.bf16.msra.mxu0 %v146
    %160 = vmatpush.bf16.msra.mxu0 %v145
    %161 = vmatpush.bf16.msra.mxu0 %v144
    %162 = vmatpush.bf16.msra.mxu0 %v143
    %163 = vmatpush.bf16.msra.mxu0 %v142
    %164 = vmatpush.bf16.msra.mxu0 %v141
    %165 = vmatmul.bf16.gmra.mxu0 %v107
    %v166 = vpop.f32.mrf.mxu0
    %v167 = vadd.f32 0.0, %v166
    %v168 = vpop.f32.mrf.mxu0
    %v169 = vadd.f32 0.0, %v168
    %170 = vdwg.mxu0
    %v171 = vld [vmem:[#allocation6] sm:$0xf]
    %v172 = vld [vmem:[#allocation6 + $0x4] sm:$0xf]
    %v173 = vld [vmem:[#allocation6 + $0x8] sm:$0xf]
    %v174 = vld [vmem:[#allocation6 + $0xc] sm:$0xf]
    %v175 = vld [vmem:[#allocation6 + $0x10] sm:$0xf]
    %v176 = vld [vmem:[#allocation6 + $0x14] sm:$0xf]
    %v177 = vld [vmem:[#allocation6 + $0x18] sm:$0xf]
    %v178 = vld [vmem:[#allocation6 + $0x1c] sm:$0xf]
    %v179 = vld [vmem:[#allocation6 + $0x20] sm:$0xf]
    %v180 = vld [vmem:[#allocation6 + $0x24] sm:$0xf]
    %v181 = vld [vmem:[#allocation6 + $0x28] sm:$0xf]
    %v182 = vld [vmem:[#allocation6 + $0x2c] sm:$0xf]
    %v183 = vld [vmem:[#allocation6 + $0x30] sm:$0xf]
    %v184 = vld [vmem:[#allocation6 + $0x34] sm:$0xf]
    %v185 = vld [vmem:[#allocation6 + $0x38] sm:$0xf]
    %v186 = vld [vmem:[#allocation6 + $0x3c] sm:$0xf]
    %v187 = vld [vmem:[#allocation9] sm:$0xf]
    %v188 = vld [vmem:[#allocation9 + $0x4] sm:$0xf]
    %v189 = vld [vmem:[#allocation9 + $0x8] sm:$0xf]
    %v190 = vld [vmem:[#allocation9 + $0xc] sm:$0xf]
    %v191 = vld [vmem:[#allocation9 + $0x10] sm:$0xf]
    %v192 = vld [vmem:[#allocation9 + $0x14] sm:$0xf]
    %v193 = vld [vmem:[#allocation9 + $0x18] sm:$0xf]
    %v194 = vld [vmem:[#allocation9 + $0x1c] sm:$0xf]
    %v195 = vld [vmem:[#allocation9 + $0x20] sm:$0xf]
    %v196 = vld [vmem:[#allocation9 + $0x24] sm:$0xf]
    %v197 = vld [vmem:[#allocation9 + $0x28] sm:$0xf]
    %v198 = vld [vmem:[#allocation9 + $0x2c] sm:$0xf]
    %v199 = vld [vmem:[#allocation9 + $0x30] sm:$0xf]
    %v200 = vld [vmem:[#allocation9 + $0x34] sm:$0xf]
    %v201 = vld [vmem:[#allocation9 + $0x38] sm:$0xf]
    %v202 = vld [vmem:[#allocation9 + $0x3c] sm:$0xf]
    %v219 = vunpack.c.l.b16 %v171
    %v220 = vunpack.c.l.b16 %v172
    %v221 = vunpack.c.l.b16 %v173
    %v222 = vunpack.c.l.b16 %v174
    %v223 = vunpack.c.l.b16 %v175
    %v224 = vunpack.c.l.b16 %v176
    %v225 = vunpack.c.l.b16 %v177
    %v226 = vunpack.c.l.b16 %v178
    %v227 = vunpack.c.l.b16 %v179
    %v228 = vunpack.c.l.b16 %v180
    %v229 = vunpack.c.l.b16 %v181
    %v230 = vunpack.c.l.b16 %v182
    %v231 = vunpack.c.l.b16 %v183
    %v232 = vunpack.c.l.b16 %v184
    %v233 = vunpack.c.l.b16 %v185
    %v234 = vunpack.c.l.b16 %v186
    %v235 = vpack.c.b16 %v220, %v219
    %v236 = vpack.c.b16 %v222, %v221
    %v237 = vpack.c.b16 %v224, %v223
    %v238 = vpack.c.b16 %v226, %v225
    %v239 = vpack.c.b16 %v228, %v227
    %v240 = vpack.c.b16 %v230, %v229
    %v241 = vpack.c.b16 %v232, %v231
    %v242 = vpack.c.b16 %v234, %v233
    %v267 = vunpack.c.l.b16 %v187
    %v268 = vunpack.c.l.b16 %v188
    %v269 = vunpack.c.l.b16 %v189
    %v270 = vunpack.c.l.b16 %v190
    %v271 = vunpack.c.l.b16 %v191
    %v272 = vunpack.c.l.b16 %v192
    %v273 = vunpack.c.l.b16 %v193
    %v274 = vunpack.c.l.b16 %v194
    %v275 = vunpack.c.l.b16 %v195
    %v276 = vunpack.c.l.b16 %v196
    %v277 = vunpack.c.l.b16 %v197
    %v278 = vunpack.c.l.b16 %v198
    %v279 = vunpack.c.l.b16 %v199
    %v280 = vunpack.c.l.b16 %v200
    %v281 = vunpack.c.l.b16 %v201
    %v282 = vunpack.c.l.b16 %v202
    %v283 = vpack.c.b16 %v268, %v267
    %v284 = vpack.c.b16 %v270, %v269
    %v285 = vpack.c.b16 %v272, %v271
    %v286 = vpack.c.b16 %v274, %v273
    %v287 = vpack.c.b16 %v276, %v275
    %v288 = vpack.c.b16 %v278, %v277
    %v289 = vpack.c.b16 %v280, %v279
    %v290 = vpack.c.b16 %v282, %v281
    %299 = vmatpush.bf16.msra.mxu0 %v290
    %300 = vmatpush.bf16.msra.mxu0 %v289
    %301 = vmatpush.bf16.msra.mxu0 %v288
    %302 = vmatpush.bf16.msra.mxu0 %v287
    %303 = vmatpush.bf16.msra.mxu0 %v286
    %304 = vmatpush.bf16.msra.mxu0 %v285
    %305 = vmatpush.bf16.msra.mxu0 %v284
    %306 = vmatpush.bf16.msra.mxu0 %v283
    %307 = vmatmul.bf16.gmra.mxu0 %v235
    %v308 = vpop.f32.mrf.mxu0
    %v309 = vadd.f32 0.0, %v308
    %v310 = vpop.f32.mrf.mxu0
    %v311 = vadd.f32 0.0, %v310
    %312 = vmatmul.bf16.gmra.mxu0 %v236
    %v313 = vpop.f32.mrf.mxu0
    %v314 = vadd.f32 0.0, %v313
    %v315 = vpop.f32.mrf.mxu0
    %v316 = vadd.f32 0.0, %v315
    %317 = vmatmul.bf16.gmra.mxu0 %v237
    %v318 = vpop.f32.mrf.mxu0
    %v319 = vadd.f32 0.0, %v318
    %v320 = vpop.f32.mrf.mxu0
    %v321 = vadd.f32 0.0, %v320
    %322 = vmatmul.bf16.gmra.mxu0 %v238
    %v323 = vpop.f32.mrf.mxu0
    %v324 = vadd.f32 0.0, %v323
    %v325 = vpop.f32.mrf.mxu0
    %v326 = vadd.f32 0.0, %v325
    %327 = vmatmul.bf16.gmra.mxu0 %v239
    %v328 = vpop.f32.mrf.mxu0
    %v329 = vadd.f32 0.0, %v328
    %v330 = vpop.f32.mrf.mxu0
    %v331 = vadd.f32 0.0, %v330
    %332 = vmatmul.bf16.gmra.mxu0 %v240
    %v333 = vpop.f32.mrf.mxu0
    %v334 = vadd.f32 0.0, %v333
    %v335 = vpop.f32.mrf.mxu0
    %v336 = vadd.f32 0.0, %v335
    %337 = vmatmul.bf16.gmra.mxu0 %v241
    %v338 = vpop.f32.mrf.mxu0
    %v339 = vadd.f32 0.0, %v338
    %v340 = vpop.f32.mrf.mxu0
    %v341 = vadd.f32 0.0, %v340
    %342 = vmatmul.bf16.gmra.mxu0 %v242
    %v343 = vpop.f32.mrf.mxu0
    %v344 = vadd.f32 0.0, %v343
    %v345 = vpop.f32.mrf.mxu0
    %v346 = vadd.f32 0.0, %v345
    %347 = vdwg.mxu0
    %v348 = vmul.f32 %v167, %v167
    %v349 = vmul.f32 %v169, %v169
    %350 = vadd.xlane.f32.xlu0 %v348
    %v351 = vpop.xlane.xlu0 %350
    %352 = vadd.xlane.f32.xlu0 %v349
    %v353 = vpop.xlane.xlu0 %352
    %v354 = vadd.f32 %v351, 1e-12
    %v355 = vadd.f32 %v353, 1e-12
    %v356 = vrsqrt.pop %v354
    %v357 = vmul.f32 %v356, %v354
    %v358 = vmul.f32 %v357, %v356
    %v359 = vmul.f32 0.5, %v358
    %v360 = vsub.f32 1.5, %v359
    %v361 = vmul.f32 %v356, %v360
    %vm362 = vweird.f32 %v354
    %vm363 = vweird.f32 %v356
    %vm364 = vmor %vm362, %vm363
    %v365 = vsel %vm364, %v356, %v361
    %v366 = vrsqrt.pop %v355
    %v367 = vmul.f32 %v366, %v355
    %v368 = vmul.f32 %v367, %v366
    %v369 = vmul.f32 0.5, %v368
    %v370 = vsub.f32 1.5, %v369
    %v371 = vmul.f32 %v366, %v370
    %vm372 = vweird.f32 %v355
    %vm373 = vweird.f32 %v366
    %vm374 = vmor %vm372, %vm373
    %v375 = vsel %vm374, %v366, %v371
    %v376 = vmul.f32 %v309, %v309
    %v377 = vmul.f32 %v311, %v311
    %v378 = vmul.f32 %v314, %v314
    %v379 = vmul.f32 %v316, %v316
    %v380 = vmul.f32 %v319, %v319
    %v381 = vmul.f32 %v321, %v321
    %v382 = vmul.f32 %v324, %v324
    %v383 = vmul.f32 %v326, %v326
    %v384 = vmul.f32 %v329, %v329
    %v385 = vmul.f32 %v331, %v331
    %v386 = vmul.f32 %v334, %v334
    %v387 = vmul.f32 %v336, %v336
    %v388 = vmul.f32 %v339, %v339
    %v389 = vmul.f32 %v341, %v341
    %v390 = vmul.f32 %v344, %v344
    %v391 = vmul.f32 %v346, %v346
    %392 = vadd.xlane.f32.xlu0 %v376
    %v393 = vpop.xlane.xlu0 %392
    %394 = vadd.xlane.f32.xlu0 %v377
    %v395 = vpop.xlane.xlu0 %394
    %396 = vadd.xlane.f32.xlu0 %v378
    %v397 = vpop.xlane.xlu0 %396
    %398 = vadd.xlane.f32.xlu0 %v379
    %v399 = vpop.xlane.xlu0 %398
    %400 = vadd.xlane.f32.xlu0 %v380
    %v401 = vpop.xlane.xlu0 %400
    %402 = vadd.xlane.f32.xlu0 %v381
    %v403 = vpop.xlane.xlu0 %402
    %404 = vadd.xlane.f32.xlu0 %v382
    %v405 = vpop.xlane.xlu0 %404
    %406 = vadd.xlane.f32.xlu0 %v383
    %v407 = vpop.xlane.xlu0 %406
    %408 = vadd.xlane.f32.xlu0 %v384
    %v409 = vpop.xlane.xlu0 %408
    %410 = vadd.xlane.f32.xlu0 %v385
    %v411 = vpop.xlane.xlu0 %410
    %412 = vadd.xlane.f32.xlu0 %v386
    %v413 = vpop.xlane.xlu0 %412
    %414 = vadd.xlane.f32.xlu0 %v387
    %v415 = vpop.xlane.xlu0 %414
    %416 = vadd.xlane.f32.xlu0 %v388
    %v417 = vpop.xlane.xlu0 %416
    %418 = vadd.xlane.f32.xlu0 %v389
    %v419 = vpop.xlane.xlu0 %418
    %420 = vadd.xlane.f32.xlu0 %v390
    %v421 = vpop.xlane.xlu0 %420
    %422 = vadd.xlane.f32.xlu0 %v391
    %v423 = vpop.xlane.xlu0 %422
    %v424 = vadd.f32 %v393, 1e-12
    %v425 = vadd.f32 %v395, 1e-12
    %v426 = vadd.f32 %v397, 1e-12
    %v427 = vadd.f32 %v399, 1e-12
    %v428 = vadd.f32 %v401, 1e-12
    %v429 = vadd.f32 %v403, 1e-12
    %v430 = vadd.f32 %v405, 1e-12
    %v431 = vadd.f32 %v407, 1e-12
    %v432 = vadd.f32 %v409, 1e-12
    %v433 = vadd.f32 %v411, 1e-12
    %v434 = vadd.f32 %v413, 1e-12
    %v435 = vadd.f32 %v415, 1e-12
    %v436 = vadd.f32 %v417, 1e-12
    %v437 = vadd.f32 %v419, 1e-12
    %v438 = vadd.f32 %v421, 1e-12
    %v439 = vadd.f32 %v423, 1e-12
    %v440 = vrsqrt.pop %v424
    %v441 = vmul.f32 %v440, %v424
    %v442 = vmul.f32 %v441, %v440
    %v443 = vmul.f32 0.5, %v442
    %v444 = vsub.f32 1.5, %v443
    %v445 = vmul.f32 %v440, %v444
    %vm446 = vweird.f32 %v424
    %vm447 = vweird.f32 %v440
    %vm448 = vmor %vm446, %vm447
    %v449 = vsel %vm448, %v440, %v445
    %v450 = vrsqrt.pop %v425
    %v451 = vmul.f32 %v450, %v425
    %v452 = vmul.f32 %v451, %v450
    %v453 = vmul.f32 0.5, %v452
    %v454 = vsub.f32 1.5, %v453
    %v455 = vmul.f32 %v450, %v454
    %vm456 = vweird.f32 %v425
    %vm457 = vweird.f32 %v450
    %vm458 = vmor %vm456, %vm457
    %v459 = vsel %vm458, %v450, %v455
    %v460 = vrsqrt.pop %v426
    %v461 = vmul.f32 %v460, %v426
    %v462 = vmul.f32 %v461, %v460
    %v463 = vmul.f32 0.5, %v462
    %v464 = vsub.f32 1.5, %v463
    %v465 = vmul.f32 %v460, %v464
    %vm466 = vweird.f32 %v426
    %vm467 = vweird.f32 %v460
    %vm468 = vmor %vm466, %vm467
    %v469 = vsel %vm468, %v460, %v465
    %v470 = vrsqrt.pop %v427
    %v471 = vmul.f32 %v470, %v427
    %v472 = vmul.f32 %v471, %v470
    %v473 = vmul.f32 0.5, %v472
    %v474 = vsub.f32 1.5, %v473
    %v475 = vmul.f32 %v470, %v474
    %vm476 = vweird.f32 %v427
    %vm477 = vweird.f32 %v470
    %vm478 = vmor %vm476, %vm477
    %v479 = vsel %vm478, %v470, %v475
    %v480 = vrsqrt.pop %v428
    %v481 = vmul.f32 %v480, %v428
    %v482 = vmul.f32 %v481, %v480
    %v483 = vmul.f32 0.5, %v482
    %v484 = vsub.f32 1.5, %v483
    %v485 = vmul.f32 %v480, %v484
    %vm486 = vweird.f32 %v428
    %vm487 = vweird.f32 %v480
    %vm488 = vmor %vm486, %vm487
    %v489 = vsel %vm488, %v480, %v485
    %v490 = vrsqrt.pop %v429
    %v491 = vmul.f32 %v490, %v429
    %v492 = vmul.f32 %v491, %v490
    %v493 = vmul.f32 0.5, %v492
    %v494 = vsub.f32 1.5, %v493
    %v495 = vmul.f32 %v490, %v494
    %vm496 = vweird.f32 %v429
    %vm497 = vweird.f32 %v490
    %vm498 = vmor %vm496, %vm497
    %v499 = vsel %vm498, %v490, %v495
    %v500 = vrsqrt.pop %v430
    %v501 = vmul.f32 %v500, %v430
    %v502 = vmul.f32 %v501, %v500
    %v503 = vmul.f32 0.5, %v502
    %v504 = vsub.f32 1.5, %v503
    %v505 = vmul.f32 %v500, %v504
    %vm506 = vweird.f32 %v430
    %vm507 = vweird.f32 %v500
    %vm508 = vmor %vm506, %vm507
    %v509 = vsel %vm508, %v500, %v505
    %v510 = vrsqrt.pop %v431
    %v511 = vmul.f32 %v510, %v431
    %v512 = vmul.f32 %v511, %v510
    %v513 = vmul.f32 0.5, %v512
    %v514 = vsub.f32 1.5, %v513
    %v515 = vmul.f32 %v510, %v514
    %vm516 = vweird.f32 %v431
    %vm517 = vweird.f32 %v510
    %vm518 = vmor %vm516, %vm517
    %v519 = vsel %vm518, %v510, %v515
    %v520 = vrsqrt.pop %v432
    %v521 = vmul.f32 %v520, %v432
    %v522 = vmul.f32 %v521, %v520
    %v523 = vmul.f32 0.5, %v522
    %v524 = vsub.f32 1.5, %v523
    %v525 = vmul.f32 %v520, %v524
    %vm526 = vweird.f32 %v432
    %vm527 = vweird.f32 %v520
    %vm528 = vmor %vm526, %vm527
    %v529 = vsel %vm528, %v520, %v525
    %v530 = vrsqrt.pop %v433
    %v531 = vmul.f32 %v530, %v433
    %v532 = vmul.f32 %v531, %v530
    %v533 = vmul.f32 0.5, %v532
    %v534 = vsub.f32 1.5, %v533
    %v535 = vmul.f32 %v530, %v534
    %vm536 = vweird.f32 %v433
    %vm537 = vweird.f32 %v530
    %vm538 = vmor %vm536, %vm537
    %v539 = vsel %vm538, %v530, %v535
    %v540 = vrsqrt.pop %v434
    %v541 = vmul.f32 %v540, %v434
    %v542 = vmul.f32 %v541, %v540
    %v543 = vmul.f32 0.5, %v542
    %v544 = vsub.f32 1.5, %v543
    %v545 = vmul.f32 %v540, %v544
    %vm546 = vweird.f32 %v434
    %vm547 = vweird.f32 %v540
    %vm548 = vmor %vm546, %vm547
    %v549 = vsel %vm548, %v540, %v545
    %v550 = vrsqrt.pop %v435
    %v551 = vmul.f32 %v550, %v435
    %v552 = vmul.f32 %v551, %v550
    %v553 = vmul.f32 0.5, %v552
    %v554 = vsub.f32 1.5, %v553
    %v555 = vmul.f32 %v550, %v554
    %vm556 = vweird.f32 %v435
    %vm557 = vweird.f32 %v550
    %vm558 = vmor %vm556, %vm557
    %v559 = vsel %vm558, %v550, %v555
    %v560 = vrsqrt.pop %v436
    %v561 = vmul.f32 %v560, %v436
    %v562 = vmul.f32 %v561, %v560
    %v563 = vmul.f32 0.5, %v562
    %v564 = vsub.f32 1.5, %v563
    %v565 = vmul.f32 %v560, %v564
    %vm566 = vweird.f32 %v436
    %vm567 = vweird.f32 %v560
    %vm568 = vmor %vm566, %vm567
    %v569 = vsel %vm568, %v560, %v565
    %v570 = vrsqrt.pop %v437
    %v571 = vmul.f32 %v570, %v437
    %v572 = vmul.f32 %v571, %v570
    %v573 = vmul.f32 0.5, %v572
    %v574 = vsub.f32 1.5, %v573
    %v575 = vmul.f32 %v570, %v574
    %vm576 = vweird.f32 %v437
    %vm577 = vweird.f32 %v570
    %vm578 = vmor %vm576, %vm577
    %v579 = vsel %vm578, %v570, %v575
    %v580 = vrsqrt.pop %v438
    %v581 = vmul.f32 %v580, %v438
    %v582 = vmul.f32 %v581, %v580
    %v583 = vmul.f32 0.5, %v582
    %v584 = vsub.f32 1.5, %v583
    %v585 = vmul.f32 %v580, %v584
    %vm586 = vweird.f32 %v438
    %vm587 = vweird.f32 %v580
    %vm588 = vmor %vm586, %vm587
    %v589 = vsel %vm588, %v580, %v585
    %v590 = vrsqrt.pop %v439
    %v591 = vmul.f32 %v590, %v439
    %v592 = vmul.f32 %v591, %v590
    %v593 = vmul.f32 0.5, %v592
    %v594 = vsub.f32 1.5, %v593
    %v595 = vmul.f32 %v590, %v594
    %vm596 = vweird.f32 %v439
    %vm597 = vweird.f32 %v590
    %vm598 = vmor %vm596, %vm597
    %v599 = vsel %vm598, %v590, %v595
    %v600 = vmul.f32 %v167, %v365
    %v601 = vmul.f32 %v169, %v375
    %s602 = sld [smem:[#allocation2]]
    %v603 = vstv %s602
    %v604 = vmul.f32 %v449, %v603
    %v605 = vmul.f32 %v459, %v603
    %v606 = vmul.f32 %v469, %v603
    %v607 = vmul.f32 %v479, %v603
    %v608 = vmul.f32 %v489, %v603
    %v609 = vmul.f32 %v499, %v603
    %v610 = vmul.f32 %v509, %v603
    %v611 = vmul.f32 %v519, %v603
    %v612 = vmul.f32 %v529, %v603
    %v613 = vmul.f32 %v539, %v603
    %v614 = vmul.f32 %v549, %v603
    %v615 = vmul.f32 %v559, %v603
    %v616 = vmul.f32 %v569, %v603
    %v617 = vmul.f32 %v579, %v603
    %v618 = vmul.f32 %v589, %v603
    %v619 = vmul.f32 %v599, %v603
    %v620 = vmul.f32 %v309, %v604
    %v621 = vmul.f32 %v311, %v605
    %v622 = vmul.f32 %v314, %v606
    %v623 = vmul.f32 %v316, %v607
    %v624 = vmul.f32 %v319, %v608
    %v625 = vmul.f32 %v321, %v609
    %v626 = vmul.f32 %v324, %v610
    %v627 = vmul.f32 %v326, %v611
    %v628 = vmul.f32 %v329, %v612
    %v629 = vmul.f32 %v331, %v613
    %v630 = vmul.f32 %v334, %v614
    %v631 = vmul.f32 %v336, %v615
    %v632 = vmul.f32 %v339, %v616
    %v633 = vmul.f32 %v341, %v617
    %v634 = vmul.f32 %v344, %v618
    %v635 = vmul.f32 %v346, %v619
    %v636 = vpack.c.bf16 %v601, %v600
    %v637 = vpack.c.bf16 %v621, %v620
    %v638 = vpack.c.bf16 %v623, %v622
    %v639 = vpack.c.bf16 %v625, %v624
    %v640 = vpack.c.bf16 %v627, %v626
    %v641 = vpack.c.bf16 %v629, %v628
    %v642 = vpack.c.bf16 %v631, %v630
    %v643 = vpack.c.bf16 %v633, %v632
    %v644 = vpack.c.bf16 %v635, %v634
    %645 = vmatpush.bf16.xpose.msra.mxu0 %v644
    %646 = vmatpush.bf16.xpose.msra.mxu0 %v643
    %647 = vmatpush.bf16.xpose.msra.mxu0 %v642
    %648 = vmatpush.bf16.xpose.msra.mxu0 %v641
    %649 = vmatpush.bf16.xpose.msra.mxu0 %v640
    %650 = vmatpush.bf16.xpose.msra.mxu0 %v639
    %651 = vmatpush.bf16.xpose.msra.mxu0 %v638
    %652 = vmatpush.bf16.xpose.msra.mxu0 %v637
    %653 = vmatmul.bf16.gmra.mxu0 %v636
    %v654 = vpop.f32.mrf.mxu0
    %v655 = vadd.f32 0.0, %v654
    %v656 = vpop.f32.mrf.mxu0
    %v657 = vadd.f32 0.0, %v656
    %658 = vdwg.mxu0
    %659 = vst [vmem:[#allocation11] sm:$0xff] %v655
    %660 = vst [vmem:[#allocation11 + $0x8] sm:$0xff] %v657
    // Predicated region
    $region38: #{tpu_custom_call.1} parent=1 // pred_check
      _
    $region39: #{tpu_custom_call.1} parent=1 // pred_check_branch
      %662 = sbr.rel (0) target = $region41
    $region40: #{tpu_custom_call.1} parent=1 // pred_region
      %664 = vsyncadd [#allocation5], 0
      %s665 = sshll.u32 [#allocation11], 4
      %s666 = int_to_ptr.vmem [resolvable:$true] %s665
      %s667 = sshll.u32 %s5, 4
      %s668 = int_to_ptr.hbm [resolvable:$true] %s667
      %673 = dma.vmem_to_hbm [thread:$0]  %s666, 256, %s668, [#allocation5], 128, 128, 8
    $region41: #{tpu_custom_call.1} parent=1 // pred_fallthru
      _
    // Predicated region
    $region42: #{tpu_custom_call.1} parent=1 // pred_check
      _
    $region43: #{tpu_custom_call.1} parent=1 // pred_check_branch
      %675 = sbr.rel (0) target = $region45
    $region44: #{tpu_custom_call.1} parent=1 // pred_region
      %677 = dma.done [#allocation5], 256
    $region45: #{tpu_custom_call.1} parent=1 // pred_fallthru
      _
    %678 = vsyncpa [#allocation4], 1
    %679 = vsyncpa [#allocation7], 1
    %680 = vsyncpa [#allocation10], 1
    %681 = vsyncpa [#allocation5], 1

</llo_original>
